<compile_context>
chip_gen: v7x
topology: tpu7x:2x2x1
jax: 0.10.0
libtpu: 0.0.40
codegen_flags: <defaults>
</compile_context>

<pallas_src>
import jax
import jax.numpy as jnp
import numpy as np
from jax.experimental import pallas as pl
from jax.experimental.pallas import tpu as pltpu


def _vmem_capacity_bytes():
    """Physical VMEM per TensorCore; conservative fallback if the query fails."""
    try:
        cap = getattr(pltpu.get_tpu_info(), "vmem_capacity_bytes", None)
        if cap:
            return int(cap)
    except Exception:
        pass
    return 64 * 1024 * 1024  # v7x per-TC VMEM (smallest current generation)


def _min_value(dtype):
    dtype = np.dtype(dtype)
    if jnp.issubdtype(dtype, jnp.floating):
        return -jnp.inf
    if jnp.issubdtype(dtype, jnp.integer):
        return int(jnp.iinfo(dtype).min)
    return 0


def _pick_tile(dim, candidates):
    for c in candidates:
        if c <= dim and dim % c == 0:
            return c
    return dim


def _largest_divisor_leq(n, cap):
    cap = max(1, min(n, cap))
    for d in range(cap, 0, -1):
        if n % d == 0:
            return d
    return 1


def _make_kernel(single_k):
    if single_k:
        def kernel(t1_ref, t2_ref, o_ref):
            o_ref[...] = jnp.maximum(jnp.max(t1_ref[...], axis=0),
                                     jnp.max(t2_ref[...], axis=0))
    else:
        def kernel(t1_ref, t2_ref, o_ref):
            m = jnp.maximum(jnp.max(t1_ref[...], axis=0),
                            jnp.max(t2_ref[...], axis=0))
            k = pl.program_id(2)

            @pl.when(k == 0)
            def _init():
                o_ref[...] = m

            @pl.when(k > 0)
            def _acc():
                o_ref[...] = jnp.maximum(o_ref[...], m)
    return kernel


def max_pooling_layer(tensor1, tensor2, *, max_batch_chunk=None):
    """Pallas equivalent of MaxPoolingLayer.forward(tensor1, tensor2).

    tensor1: (B1, *rest), tensor2: (B2, *rest) with identical trailing dims.
    Returns: (*rest,)
    """
    assert tensor1.shape[1:] == tensor2.shape[1:], "trailing dims must match"
    assert tensor1.dtype == tensor2.dtype
    rest = tensor1.shape[1:]
    B1, B2 = int(tensor1.shape[0]), int(tensor2.shape[0])
    dtype = tensor1.dtype
    itemsize = int(np.dtype(dtype).itemsize)

    # ---- flatten trailing dims to a lane-dense (S, H) slab -------------------
    if len(rest) == 0:
        S0, H0 = 1, 1
    else:
        H0 = int(rest[-1])
        S0 = int(np.prod(rest[:-1], dtype=np.int64)) if len(rest) > 1 else 1
    t1 = tensor1.reshape(B1, S0, H0)
    t2 = tensor2.reshape(B2, S0, H0)

    # Pad H up to a multiple of 128 (fill with the identity of max) so the last
    # dim is always lane-aligned -> unmasked vst, no full-dim fallback tiles.
    Hp = -(-H0 // 128) * 128
    if Hp != H0:
        fill = _min_value(dtype)
        pad = ((0, 0), (0, 0), (0, Hp - H0))
        t1 = jnp.pad(t1, pad, constant_values=fill)
        t2 = jnp.pad(t2, pad, constant_values=fill)

    # Fold sublane rows into the lane axis when H is narrow: lane-dense output
    # is the biggest measured lever (wide unmasked stores, fewer grid steps).
    # (B, S, H) -> (B, S/k, k*H) is a contiguous row-major reshape (free).
    S, H = S0, Hp
    fold = 1
    while (H * fold < 1024) and (S % (fold * 2) == 0) and (H * fold * 2 <= 8192):
        fold *= 2
    if fold > 1:
        S //= fold
        H *= fold
        t1 = t1.reshape(B1, S, H)
        t2 = t2.reshape(B2, S, H)

    # ---- tile / chunk selection (generation-aware VMEM budget) ---------------
    vmem_cap = _vmem_capacity_bytes()
    budget_total = int(vmem_cap * 0.70)    # total in-flight pipeline buffers
    vmem_limit = int(vmem_cap * 0.80)      # scoped-VMEM ceiling we request

    # Sublane tile floor is dtype-aware (packed dtypes want >= 16/32 rows).
    ts_min = 8 if itemsize >= 4 else (16 if itemsize == 2 else 32)

    TH = H if H <= 8192 else _pick_tile(H, (8192, 4096, 2048, 1024, 512, 256, 128))
    TS = _pick_tile(S, tuple(c for c in (512, 256, 128, 64, 32, 16, 8) if c >= ts_min))

    def _fits(b1c, b2c, ts, th):
        # 2 pipeline buffers per input block + 2 for the output block.
        return itemsize * ts * th * (2 * (b1c + b2c) + 2) <= budget_total

    KB1, KB2 = B1, B2
    # (1) Batch chunking first: caps VMEM independently of B while keeping the
    #     big lane-dense spatial tile.
    if not _fits(KB1, KB2, TS, TH):
        rows_cap = budget_total // (itemsize * TS * TH)
        rows_each = max(1, (rows_cap - 2) // 4)
        KB1 = _largest_divisor_leq(B1, rows_each)
        KB2 = _largest_divisor_leq(B2, rows_each)
    if max_batch_chunk is not None:
        KB1 = _largest_divisor_leq(B1, min(KB1, max_batch_chunk))
        KB2 = _largest_divisor_leq(B2, min(KB2, max_batch_chunk))
    # (2) Then shrink sublanes, (3) lanes only as a last resort.
    while not _fits(KB1, KB2, TS, TH) and TS % 2 == 0 and (TS // 2) % ts_min == 0:
        TS //= 2
    while not _fits(KB1, KB2, TS, TH) and TH % 2 == 0 and (TH // 2) % 128 == 0:
        TH //= 2

    nK1, nK2 = B1 // KB1, B2 // KB2
    nK = max(nK1, nK2)
    grid = (S // TS, H // TH, nK)
    # TODO(synk): on v7x (2 TCs) prefer >= 2 steps on a parallel axis so megacore
    # can shard; for a single-tile problem the second core idles (minor: HBM is
    # shared, so this only costs overhead hiding, not bandwidth).

    def _in_map(nk_i):
        if nk_i == nK:
            return lambda i, j, k: (k, i, j)
        last = nk_i - 1
        # Clamp: re-reducing the last chunk is exact (max is idempotent).
        return lambda i, j, k: (jnp.minimum(k, last), i, j)

    cost = pl.CostEstimate(
        flops=(B1 + B2) * S0 * H0,                          # ~1 compare / element
        transcendentals=0,
        bytes_accessed=(B1 + B2 + 1) * S0 * H0 * itemsize,  # pure-bandwidth op
    )

    out_2d = pl.pallas_call(
        _make_kernel(single_k=(nK == 1)),
        out_shape=jax.ShapeDtypeStruct((S, H), dtype),
        grid_spec=pl.GridSpec(
            grid=grid,
            in_specs=[
                pl.BlockSpec((KB1, TS, TH), _in_map(nK1)),
                pl.BlockSpec((KB2, TS, TH), _in_map(nK2)),
            ],
            out_specs=pl.BlockSpec((TS, TH), lambda i, j, k: (i, j)),
        ),
        compiler_params=pltpu.CompilerParams(
            dimension_semantics=("parallel", "parallel", "arbitrary"),
            vmem_limit_bytes=vmem_limit,
        ),
        cost_estimate=cost,
    )(t1, t2)

    # ---- undo fold / padding --------------------------------------------------
    out = out_2d.reshape(S0, Hp)[:, :H0]
    return out.reshape(rest)


if __name__ == "__main__":
    key = jax.random.PRNGKey(0)
    k1, k2, k3, k4 = jax.random.split(key, 4)

    # Case 1: f32, batch1=4 + batch2=6 on the concat axis, seq=24, hidden=256.
    t1 = jax.random.normal(k1, (4, 24, 256), dtype=jnp.float32)
    t2 = jax.random.normal(k2, (6, 24, 256), dtype=jnp.float32)
    out = jax.block_until_ready(max_pooling_layer(t1, t2))
    ref = jnp.max(jnp.concatenate([t1, t2], axis=0), axis=0)
    assert out.shape == ref.shape == (24, 256)
    assert jnp.array_equal(out, ref), "case 1 mismatch vs reference"

    # Case 2: bf16 with H=96 (not a multiple of 128) exercises the pad+fold path.
    t1b = jax.random.normal(k3, (3, 8, 96), dtype=jnp.bfloat16)
    t2b = jax.random.normal(k4, (5, 8, 96), dtype=jnp.bfloat16)
    outb = jax.block_until_ready(max_pooling_layer(t1b, t2b))
    refb = jnp.max(jnp.concatenate([t1b, t2b], axis=0), axis=0)
    assert outb.shape == refb.shape == (8, 96)
    assert jnp.array_equal(outb, refb), "case 2 mismatch vs reference"

    # Case 3: force the batch-chunked (trailing 'arbitrary' K axis) path.
    outc = jax.block_until_ready(max_pooling_layer(t1, t2, max_batch_chunk=2))
    assert jnp.array_equal(outc, ref), "case 3 mismatch vs reference"

    print("KERNEL_OK")
</pallas_src>

<mosaic_0001>
module attributes {stable_mosaic.version = 11 : i64} {
  func.func @kernel(%arg0: i32, %arg1: i32, %arg2: i32, %arg3: memref<4x6x1024xf32, #tpu.memory_space<vmem>>, %arg4: memref<6x6x1024xf32, #tpu.memory_space<vmem>>, %arg5: memref<6x1024xf32, #tpu.memory_space<vmem>>) attributes {dimension_semantics = [#tpu.dimension_semantics<parallel>, #tpu.dimension_semantics<parallel>, #tpu.dimension_semantics<arbitrary>], iteration_bounds = array<i64: 1, 1, 1>, scalar_prefetch = 0 : i64, scratch_operands = 0 : i64, tpu.core_type = #tpu.core_type<tc>, window_params = [{transform_indices = @transform_0, window_bounds = array<i64: 4, 6, 1024>}, {transform_indices = @transform_1, window_bounds = array<i64: 6, 6, 1024>}, {transform_indices = @transform_2, window_bounds = array<i64: 6, 1024>}]} {
    %c0 = arith.constant 0 : index
    %c0_0 = arith.constant 0 : index
    %c0_1 = arith.constant 0 : index
    %0 = vector.load %arg3[%c0, %c0_0, %c0_1] : memref<4x6x1024xf32, #tpu.memory_space<vmem>>, vector<4x6x1024xf32>
    %cst = arith.constant dense<0xFF800000> : vector<6x1024xf32>
    %1 = vector.multi_reduction <maximumf>, %0, %cst [0] : vector<4x6x1024xf32> to vector<6x1024xf32>
    %c0_2 = arith.constant 0 : index
    %c0_3 = arith.constant 0 : index
    %c0_4 = arith.constant 0 : index
    %2 = vector.load %arg4[%c0_2, %c0_3, %c0_4] : memref<6x6x1024xf32, #tpu.memory_space<vmem>>, vector<6x6x1024xf32>
    %cst_5 = arith.constant dense<0xFF800000> : vector<6x1024xf32>
    %3 = vector.multi_reduction <maximumf>, %2, %cst_5 [0] : vector<6x6x1024xf32> to vector<6x1024xf32>
    %4 = arith.maximumf %1, %3 : vector<6x1024xf32>
    %c0_6 = arith.constant 0 : index
    %c0_7 = arith.constant 0 : index
    %5 = vector.load %arg5[%c0_6, %c0_7] : memref<6x1024xf32, #tpu.memory_space<vmem>>, vector<6x1024xf32>
    tpu.vector_store %arg5[%c0_6, %c0_7], %4 {strides = array<i32>} : memref<6x1024xf32, #tpu.memory_space<vmem>>, vector<6x1024xf32>,
    return
  }
  func.func @transform_0(%arg0: i32, %arg1: i32, %arg2: i32) -> (i32, i32, i32) {
    %c0_i32 = arith.constant 0 : i32
    return %arg2, %arg0, %arg1 : i32, i32, i32
  }
  func.func @transform_1(%arg0: i32, %arg1: i32, %arg2: i32) -> (i32, i32, i32) {
    %c0_i32 = arith.constant 0 : i32
    return %arg2, %arg0, %arg1 : i32, i32, i32
  }
  func.func @transform_2(%arg0: i32, %arg1: i32, %arg2: i32) -> (i32, i32) {
    %c0_i32 = arith.constant 0 : i32
    return %arg0, %arg1 : i32, i32
  }
}

</mosaic_0001>

<llo_original>
// kernel: tpu_custom_call.1
$region0: #{tpu_custom_call.1}
  #allocation0 [shape = 'u32[]', space=smem, size = 0x4, offset = 0x4, fixed_abs, tag = 'smem constant byte address 0x4 - core index']
  #allocation1 [shape = 'u32[144,128]{1,0:T(1,128)}', space=vmem, size = 0x12000, scoped, tag = 'internal scratch']
  %s0 = inlined_call_operand.vmem [shape: f32[4,6,1024], index: 0, kind: input, shape index: {}]
  %s1 = inlined_call_operand.vmem [shape: f32[6,6,1024], index: 1, kind: input, shape index: {}]
  %s2 = inlined_call_operand.hbm [shape: f32[6,1024], index: 2, kind: output, shape index: {}]
  %s3 = sld [smem:[#allocation0]]
  $region18: #{tpu_custom_call.1} parent=0
    _
  %s5 = ssub.s32 1, %s3
  %s6 = scalar_select 0, %s5, %s3
  $region1: #{tpu_custom_call.1} parent=0
    #allocation2 [shape = 'u8[32768]{0}', space=vmem, size = 0x8000, scoped, tag = 'output window, operand 0, single buffered']
    #allocation3 [shape = 's32[1]{0}', space=sflag, size = 0x4, scoped, tag = 'scoped memory for tpu_custom_call.1']
    %7 = vsyncpa [#allocation3], 0
    // Predicated region
    $region2: #{tpu_custom_call.1} parent=1 // pred_check
      _
    $region3: #{tpu_custom_call.1} parent=1 // pred_check_branch
      %9 = sbr.rel (0) target = $region5
    $region4: #{tpu_custom_call.1} parent=1 // pred_region
      _
    $region5: #{tpu_custom_call.1} parent=1 // pred_fallthru
      _
    // Predicated region
    $region6: #{tpu_custom_call.1} parent=1 // pred_check
      _
    $region7: #{tpu_custom_call.1} parent=1 // pred_check_branch
      %11 = sbr.rel (0) target = $region9
    $region8: #{tpu_custom_call.1} parent=1 // pred_region
      _
    $region9: #{tpu_custom_call.1} parent=1 // pred_fallthru
      _
    %v12 = vld [vmem:[%s0] sm:$0x3f]
    %v13 = vld [vmem:[%s0 + $0x8] sm:$0x3f]
    %v14 = vld [vmem:[%s0 + $0x10] sm:$0x3f]
    %v15 = vld [vmem:[%s0 + $0x18] sm:$0x3f]
    %v16 = vld [vmem:[%s0 + $0x20] sm:$0x3f]
    %v17 = vld [vmem:[%s0 + $0x28] sm:$0x3f]
    %v18 = vld [vmem:[%s0 + $0x30] sm:$0x3f]
    %v19 = vld [vmem:[%s0 + $0x38] sm:$0x3f]
    %v20 = vld [vmem:[%s0 + $0x40] sm:$0x3f]
    %v21 = vld [vmem:[%s0 + $0x48] sm:$0x3f]
    %v22 = vld [vmem:[%s0 + $0x50] sm:$0x3f]
    %v23 = vld [vmem:[%s0 + $0x58] sm:$0x3f]
    %v24 = vld [vmem:[%s0 + $0x60] sm:$0x3f]
    %v25 = vld [vmem:[%s0 + $0x68] sm:$0x3f]
    %v26 = vld [vmem:[%s0 + $0x70] sm:$0x3f]
    %v27 = vld [vmem:[%s0 + $0x78] sm:$0x3f]
    %v28 = vld [vmem:[%s0 + $0x80] sm:$0x3f]
    %v29 = vld [vmem:[%s0 + $0x88] sm:$0x3f]
    %v30 = vld [vmem:[%s0 + $0x90] sm:$0x3f]
    %v31 = vld [vmem:[%s0 + $0x98] sm:$0x3f]
    %v32 = vld [vmem:[%s0 + $0xa0] sm:$0x3f]
    %v33 = vld [vmem:[%s0 + $0xa8] sm:$0x3f]
    %v34 = vld [vmem:[%s0 + $0xb0] sm:$0x3f]
    %v35 = vld [vmem:[%s0 + $0xb8] sm:$0x3f]
    %v36 = vld [vmem:[%s0 + $0xc0] sm:$0x3f]
    %v37 = vld [vmem:[%s0 + $0xc8] sm:$0x3f]
    %v38 = vld [vmem:[%s0 + $0xd0] sm:$0x3f]
    %v39 = vld [vmem:[%s0 + $0xd8] sm:$0x3f]
    %v40 = vld [vmem:[%s0 + $0xe0] sm:$0x3f]
    %v41 = vld [vmem:[%s0 + $0xe8] sm:$0x3f]
    %v42 = vld [vmem:[%s0 + $0xf0] sm:$0x3f]
    %v43 = vld [vmem:[%s0 + $0xf8] sm:$0x3f]
    %vm44 = vcmask 1045504
    %v45 = vsel %vm44, %v12, -inf
    %v46 = vsel %vm44, %v20, -inf
    %v47 = vmax.f32 %v45, %v46
    %v48 = vsel %vm44, %v28, -inf
    %v49 = vmax.f32 %v47, %v48
    %v50 = vsel %vm44, %v36, -inf
    %v51 = vmax.f32 %v49, %v50
    %v52 = vsel %vm44, %v13, -inf
    %v53 = vsel %vm44, %v21, -inf
    %v54 = vmax.f32 %v52, %v53
    %v55 = vsel %vm44, %v29, -inf
    %v56 = vmax.f32 %v54, %v55
    %v57 = vsel %vm44, %v37, -inf
    %v58 = vmax.f32 %v56, %v57
    %v59 = vsel %vm44, %v14, -inf
    %v60 = vsel %vm44, %v22, -inf
    %v61 = vmax.f32 %v59, %v60
    %v62 = vsel %vm44, %v30, -inf
    %v63 = vmax.f32 %v61, %v62
    %v64 = vsel %vm44, %v38, -inf
    %v65 = vmax.f32 %v63, %v64
    %v66 = vsel %vm44, %v15, -inf
    %v67 = vsel %vm44, %v23, -inf
    %v68 = vmax.f32 %v66, %v67
    %v69 = vsel %vm44, %v31, -inf
    %v70 = vmax.f32 %v68, %v69
    %v71 = vsel %vm44, %v39, -inf
    %v72 = vmax.f32 %v70, %v71
    %v73 = vsel %vm44, %v16, -inf
    %v74 = vsel %vm44, %v24, -inf
    %v75 = vmax.f32 %v73, %v74
    %v76 = vsel %vm44, %v32, -inf
    %v77 = vmax.f32 %v75, %v76
    %v78 = vsel %vm44, %v40, -inf
    %v79 = vmax.f32 %v77, %v78
    %v80 = vsel %vm44, %v17, -inf
    %v81 = vsel %vm44, %v25, -inf
    %v82 = vmax.f32 %v80, %v81
    %v83 = vsel %vm44, %v33, -inf
    %v84 = vmax.f32 %v82, %v83
    %v85 = vsel %vm44, %v41, -inf
    %v86 = vmax.f32 %v84, %v85
    %v87 = vsel %vm44, %v18, -inf
    %v88 = vsel %vm44, %v26, -inf
    %v89 = vmax.f32 %v87, %v88
    %v90 = vsel %vm44, %v34, -inf
    %v91 = vmax.f32 %v89, %v90
    %v92 = vsel %vm44, %v42, -inf
    %v93 = vmax.f32 %v91, %v92
    %v94 = vsel %vm44, %v19, -inf
    %v95 = vsel %vm44, %v27, -inf
    %v96 = vmax.f32 %v94, %v95
    %v97 = vsel %vm44, %v35, -inf
    %v98 = vmax.f32 %v96, %v97
    %v99 = vsel %vm44, %v43, -inf
    %v100 = vmax.f32 %v98, %v99
    %v101 = vld [vmem:[%s1] sm:$0x3f]
    %v102 = vld [vmem:[%s1 + $0x8] sm:$0x3f]
    %v103 = vld [vmem:[%s1 + $0x10] sm:$0x3f]
    %v104 = vld [vmem:[%s1 + $0x18] sm:$0x3f]
    %v105 = vld [vmem:[%s1 + $0x20] sm:$0x3f]
    %v106 = vld [vmem:[%s1 + $0x28] sm:$0x3f]
    %v107 = vld [vmem:[%s1 + $0x30] sm:$0x3f]
    %v108 = vld [vmem:[%s1 + $0x38] sm:$0x3f]
    %v109 = vld [vmem:[%s1 + $0x40] sm:$0x3f]
    %v110 = vld [vmem:[%s1 + $0x48] sm:$0x3f]
    %v111 = vld [vmem:[%s1 + $0x50] sm:$0x3f]
    %v112 = vld [vmem:[%s1 + $0x58] sm:$0x3f]
    %v113 = vld [vmem:[%s1 + $0x60] sm:$0x3f]
    %v114 = vld [vmem:[%s1 + $0x68] sm:$0x3f]
    %v115 = vld [vmem:[%s1 + $0x70] sm:$0x3f]
    %v116 = vld [vmem:[%s1 + $0x78] sm:$0x3f]
    %v117 = vld [vmem:[%s1 + $0x80] sm:$0x3f]
    %v118 = vld [vmem:[%s1 + $0x88] sm:$0x3f]
    %v119 = vld [vmem:[%s1 + $0x90] sm:$0x3f]
    %v120 = vld [vmem:[%s1 + $0x98] sm:$0x3f]
    %v121 = vld [vmem:[%s1 + $0xa0] sm:$0x3f]
    %v122 = vld [vmem:[%s1 + $0xa8] sm:$0x3f]
    %v123 = vld [vmem:[%s1 + $0xb0] sm:$0x3f]
    %v124 = vld [vmem:[%s1 + $0xb8] sm:$0x3f]
    %v125 = vld [vmem:[%s1 + $0xc0] sm:$0x3f]
    %v126 = vld [vmem:[%s1 + $0xc8] sm:$0x3f]
    %v127 = vld [vmem:[%s1 + $0xd0] sm:$0x3f]
    %v128 = vld [vmem:[%s1 + $0xd8] sm:$0x3f]
    %v129 = vld [vmem:[%s1 + $0xe0] sm:$0x3f]
    %v130 = vld [vmem:[%s1 + $0xe8] sm:$0x3f]
    %v131 = vld [vmem:[%s1 + $0xf0] sm:$0x3f]
    %v132 = vld [vmem:[%s1 + $0xf8] sm:$0x3f]
    %v133 = vld [vmem:[%s1 + $0x100] sm:$0x3f]
    %v134 = vld [vmem:[%s1 + $0x108] sm:$0x3f]
    %v135 = vld [vmem:[%s1 + $0x110] sm:$0x3f]
    %v136 = vld [vmem:[%s1 + $0x118] sm:$0x3f]
    %v137 = vld [vmem:[%s1 + $0x120] sm:$0x3f]
    %v138 = vld [vmem:[%s1 + $0x128] sm:$0x3f]
    %v139 = vld [vmem:[%s1 + $0x130] sm:$0x3f]
    %v140 = vld [vmem:[%s1 + $0x138] sm:$0x3f]
    %v141 = vld [vmem:[%s1 + $0x140] sm:$0x3f]
    %v142 = vld [vmem:[%s1 + $0x148] sm:$0x3f]
    %v143 = vld [vmem:[%s1 + $0x150] sm:$0x3f]
    %v144 = vld [vmem:[%s1 + $0x158] sm:$0x3f]
    %v145 = vld [vmem:[%s1 + $0x160] sm:$0x3f]
    %v146 = vld [vmem:[%s1 + $0x168] sm:$0x3f]
    %v147 = vld [vmem:[%s1 + $0x170] sm:$0x3f]
    %v148 = vld [vmem:[%s1 + $0x178] sm:$0x3f]
    %v149 = vsel %vm44, %v101, -inf
    %v150 = vsel %vm44, %v109, -inf
    %v151 = vmax.f32 %v149, %v150
    %v152 = vsel %vm44, %v117, -inf
    %v153 = vmax.f32 %v151, %v152
    %v154 = vsel %vm44, %v125, -inf
    %v155 = vmax.f32 %v153, %v154
    %v156 = vsel %vm44, %v133, -inf
    %v157 = vmax.f32 %v155, %v156
    %v158 = vsel %vm44, %v141, -inf
    %v159 = vmax.f32 %v157, %v158
    %v160 = vsel %vm44, %v102, -inf
    %v161 = vsel %vm44, %v110, -inf
    %v162 = vmax.f32 %v160, %v161
    %v163 = vsel %vm44, %v118, -inf
    %v164 = vmax.f32 %v162, %v163
    %v165 = vsel %vm44, %v126, -inf
    %v166 = vmax.f32 %v164, %v165
    %v167 = vsel %vm44, %v134, -inf
    %v168 = vmax.f32 %v166, %v167
    %v169 = vsel %vm44, %v142, -inf
    %v170 = vmax.f32 %v168, %v169
    %v171 = vsel %vm44, %v103, -inf
    %v172 = vsel %vm44, %v111, -inf
    %v173 = vmax.f32 %v171, %v172
    %v174 = vsel %vm44, %v119, -inf
    %v175 = vmax.f32 %v173, %v174
    %v176 = vsel %vm44, %v127, -inf
    %v177 = vmax.f32 %v175, %v176
    %v178 = vsel %vm44, %v135, -inf
    %v179 = vmax.f32 %v177, %v178
    %v180 = vsel %vm44, %v143, -inf
    %v181 = vmax.f32 %v179, %v180
    %v182 = vsel %vm44, %v104, -inf
    %v183 = vsel %vm44, %v112, -inf
    %v184 = vmax.f32 %v182, %v183
    %v185 = vsel %vm44, %v120, -inf
    %v186 = vmax.f32 %v184, %v185
    %v187 = vsel %vm44, %v128, -inf
    %v188 = vmax.f32 %v186, %v187
    %v189 = vsel %vm44, %v136, -inf
    %v190 = vmax.f32 %v188, %v189
    %v191 = vsel %vm44, %v144, -inf
    %v192 = vmax.f32 %v190, %v191
    %v193 = vsel %vm44, %v105, -inf
    %v194 = vsel %vm44, %v113, -inf
    %v195 = vmax.f32 %v193, %v194
    %v196 = vsel %vm44, %v121, -inf
    %v197 = vmax.f32 %v195, %v196
    %v198 = vsel %vm44, %v129, -inf
    %v199 = vmax.f32 %v197, %v198
    %v200 = vsel %vm44, %v137, -inf
    %v201 = vmax.f32 %v199, %v200
    %v202 = vsel %vm44, %v145, -inf
    %v203 = vmax.f32 %v201, %v202
    %v204 = vsel %vm44, %v106, -inf
    %v205 = vsel %vm44, %v114, -inf
    %v206 = vmax.f32 %v204, %v205
    %v207 = vsel %vm44, %v122, -inf
    %v208 = vmax.f32 %v206, %v207
    %v209 = vsel %vm44, %v130, -inf
    %v210 = vmax.f32 %v208, %v209
    %v211 = vsel %vm44, %v138, -inf
    %v212 = vmax.f32 %v210, %v211
    %v213 = vsel %vm44, %v146, -inf
    %v214 = vmax.f32 %v212, %v213
    %v215 = vsel %vm44, %v107, -inf
    %v216 = vsel %vm44, %v115, -inf
    %v217 = vmax.f32 %v215, %v216
    %v218 = vsel %vm44, %v123, -inf
    %v219 = vmax.f32 %v217, %v218
    %v220 = vsel %vm44, %v131, -inf
    %v221 = vmax.f32 %v219, %v220
    %v222 = vsel %vm44, %v139, -inf
    %v223 = vmax.f32 %v221, %v222
    %v224 = vsel %vm44, %v147, -inf
    %v225 = vmax.f32 %v223, %v224
    %v226 = vsel %vm44, %v108, -inf
    %v227 = vsel %vm44, %v116, -inf
    %v228 = vmax.f32 %v226, %v227
    %v229 = vsel %vm44, %v124, -inf
    %v230 = vmax.f32 %v228, %v229
    %v231 = vsel %vm44, %v132, -inf
    %v232 = vmax.f32 %v230, %v231
    %v233 = vsel %vm44, %v140, -inf
    %v234 = vmax.f32 %v232, %v233
    %v235 = vsel %vm44, %v148, -inf
    %v236 = vmax.f32 %v234, %v235
    %v237 = vmax.f32 %v51, %v159
    %v238 = vmax.f32 %v58, %v170
    %v239 = vmax.f32 %v65, %v181
    %v240 = vmax.f32 %v72, %v192
    %v241 = vmax.f32 %v79, %v203
    %v242 = vmax.f32 %v86, %v214
    %v243 = vmax.f32 %v93, %v225
    %v244 = vmax.f32 %v100, %v236
    %245 = vst [vmem:[#allocation2] sm:$0x3f] %v237
    %246 = vst [vmem:[#allocation2 + $0x8] sm:$0x3f] %v238
    %247 = vst [vmem:[#allocation2 + $0x10] sm:$0x3f] %v239
    %248 = vst [vmem:[#allocation2 + $0x18] sm:$0x3f] %v240
    %249 = vst [vmem:[#allocation2 + $0x20] sm:$0x3f] %v241
    %250 = vst [vmem:[#allocation2 + $0x28] sm:$0x3f] %v242
    %251 = vst [vmem:[#allocation2 + $0x30] sm:$0x3f] %v243
    %252 = vst [vmem:[#allocation2 + $0x38] sm:$0x3f] %v244
    // Predicated region
    $region10: #{tpu_custom_call.1} parent=1 // pred_check
      _
    $region11: #{tpu_custom_call.1} parent=1 // pred_check_branch
      %254 = sbr.rel (0) target = $region13
    $region12: #{tpu_custom_call.1} parent=1 // pred_region
      %s256 = ssub.s32 1024, 1024
      %257 = vsyncadd [#allocation3], %s256
      %s259 = sshll.u32 [#allocation2], 4
      %s260 = int_to_ptr.vmem [resolvable:$true] %s259
      %262 = dma.vmem_to_hbm [thread:$0]  %s260, 1024, %s2, [#allocation3]
    $region13: #{tpu_custom_call.1} parent=1 // pred_fallthru
      _
    // Predicated region
    $region14: #{tpu_custom_call.1} parent=1 // pred_check
      _
    $region15: #{tpu_custom_call.1} parent=1 // pred_check_branch
      %264 = sbr.rel (0) target = $region17
    $region16: #{tpu_custom_call.1} parent=1 // pred_region
      %265 = dma.done [#allocation3], 1024
    $region17: #{tpu_custom_call.1} parent=1 // pred_fallthru
      _
    %266 = vsyncpa [#allocation3], 1

</llo_original>
